<compile_context>
chip_gen: v5e
topology: v5e:2x2
jax: 0.10.0
libtpu: 0.0.40
codegen_flags: <defaults>
</compile_context>

<pallas_src>
import functools

import jax
import jax.numpy as jnp
from jax import lax
from jax.experimental import pallas as pl
from jax.experimental.pallas import tpu as pltpu


def _round_up(a, m):
    return (a + m - 1) // m * m


def _rnn_chunk_kernel(x_ref, h0_ref, vt_ref, wt_ref, b_ref, hseq_ref,
                      h_scratch, zc_scratch, *, t_chunk, b_blk):
    """One (batch-block, time-chunk) grid step.

    Grid = (batch blocks ["parallel"], time chunks ["arbitrary", serial]).
    h_scratch carries the recurrent state across time chunks; it is re-seeded
    from h0 whenever the time index is 0 (i.e. at the start of every batch
    block), so state never leaks between batch blocks.
    """
    @pl.when(pl.program_id(1) == 0)
    def _():
        h_scratch[...] = h0_ref[...]

    # Hoisted, time-independent input projection for the WHOLE chunk: a single
    # (t_chunk*b_blk, I) x (I, h_pad) MXU matmul (bias b_V+b_W folded in the
    # wrapper). Staged into VMEM scratch so the serial loop below only keeps
    # one (b_blk, h_pad) slab live in vregs instead of the whole chunk.
    zc_scratch[...] = (
        jnp.dot(x_ref[...], vt_ref[...], preferred_element_type=jnp.float32)
        + b_ref[...])

    wt = wt_ref[...]                      # grid-invariant (h_pad, h_pad)

    def step(i, h):
        off = pl.multiple_of(i * b_blk, b_blk)
        z_t = zc_scratch[pl.ds(off, b_blk), :]
        h = jnp.tanh(z_t + jnp.dot(h.astype(wt.dtype), wt,
                                   preferred_element_type=jnp.float32))
        # Lane-dense, unmasked (b_blk, h_pad) store of this step's hidden.
        hseq_ref[pl.ds(off, b_blk), :] = h.astype(hseq_ref.dtype)
        return h

    h_scratch[...] = lax.fori_loop(0, t_chunk, step, h_scratch[...],
                                   unroll=True)


def rnn_forward(x, params, h0=None, *, t_chunk=None, batch_block=None,
                mxu_dtype=jnp.bfloat16, vmem_budget_bytes=28 << 20):
    """x: (S, B, I). Returns (h_seq (S, B, H), h_last (1, B, H)).

    mxu_dtype: dtype of the MXU operands x / V^T / W^T (the carry, bias add
      and tanh always stay float32). bf16 is the native MXU rate on every TPU
      generation; pass jnp.float32 for bit-tight agreement with an f32 ref.
    batch_block: optional batch tile; makes batch a "parallel" grid axis
      (near-2x on v7x's two TensorCores when padded batch >= 16).
    t_chunk: time-chunk size; None -> auto-sized from the VMEM budget.
    """
    S, B, I = x.shape
    W_w, W_b, V_w, V_b = params["W_w"], params["W_b"], params["V_w"], params["V_b"]
    H = W_w.shape[0]

    mxu_dtype = jnp.dtype(mxu_dtype)
    itemsize = mxu_dtype.itemsize

    # f32 vreg tiling: batch on sublanes (x8), hidden on lanes (x128).
    h_pad = _round_up(H, 128)
    b_pad = _round_up(B, 8)
    if batch_block is None:
        b_blk = b_pad
    else:
        b_blk = _round_up(max(8, min(batch_block, b_pad)), 8)
        b_pad = _round_up(b_pad, b_blk)
    n_bblk = b_pad // b_blk

    # VMEM footprint model (double-buffered pipelined blocks + scratch); used
    # both to size t_chunk and to set an explicit scoped-VMEM limit.
    fixed_bytes = (2 * (I * h_pad + h_pad * h_pad) * itemsize   # V^T, W^T
                   + 2 * h_pad * 4                              # folded bias
                   + 2 * b_blk * h_pad * 4                      # h0 block
                   + b_blk * h_pad * 4)                         # h carry scratch
    per_step_bytes = b_blk * (2 * I * itemsize      # x chunk (double-buffered)
                              + 2 * h_pad * 4       # out chunk (double-buffered)
                              + h_pad * 4)          # staged-zc scratch
    if t_chunk is None:
        avail = max(vmem_budget_bytes - fixed_bytes, per_step_bytes)
        t_chunk = int(avail // per_step_bytes)
    t_chunk = max(1, min(t_chunk, 128, S))
    # bf16 (16,128) tiling rule: the x block's sublane extent must be a
    # multiple of 16 (unless it spans the whole array).
    if itemsize == 2 and (t_chunk * b_blk) % 16 != 0:
        t_chunk = _round_up(t_chunk, 2)
    s_pad = _round_up(S, t_chunk)
    n_t = s_pad // t_chunk

    total_bytes = fixed_bytes + t_chunk * per_step_bytes
    vmem_limit = int(min(max(total_bytes + (4 << 20), 32 << 20), 64 << 20))

    # ---- operand prep (skip the extra HBM pad/copy when x already conforms).
    xf = x.astype(jnp.float32)
    if B == b_pad and S == s_pad and n_bblk == 1:
        x2 = xf.reshape(S * B, I).astype(mxu_dtype)
    else:
        x_p = jnp.zeros((s_pad, b_pad, I), jnp.float32).at[:S, :B, :].set(xf)
        # Batch-block-major, time-major-within-block 2-D slab layout.
        x_p = x_p.reshape(s_pad, n_bblk, b_blk, I).transpose(1, 0, 2, 3)
        x2 = x_p.reshape(n_bblk * s_pad * b_blk, I).astype(mxu_dtype)

    h0_p = jnp.zeros((b_pad, h_pad), jnp.float32)
    if h0 is not None:
        h0_p = h0_p.at[:B, :H].set(h0.reshape(B, H).astype(jnp.float32))

    # Pre-transposed, zero-padded weights (PyTorch Linear: y = x @ W^T + b);
    # the two biases fold into one (1, h_pad) vector kept in f32.
    vt = jnp.zeros((I, h_pad), jnp.float32).at[:, :H].set(
        V_w.T.astype(jnp.float32)).astype(mxu_dtype)
    wt = jnp.zeros((h_pad, h_pad), jnp.float32).at[:H, :H].set(
        W_w.T.astype(jnp.float32)).astype(mxu_dtype)
    bias = jnp.zeros((1, h_pad), jnp.float32).at[:, :H].set(
        (V_b + W_b).reshape(1, H).astype(jnp.float32))

    kernel = functools.partial(_rnn_chunk_kernel, t_chunk=t_chunk, b_blk=b_blk)

    grid_spec = pltpu.PrefetchScalarGridSpec(
        num_scalar_prefetch=0,
        grid=(n_bblk, n_t),
        in_specs=[
            pl.BlockSpec((t_chunk * b_blk, I), lambda b, t: (b * n_t + t, 0)),
            pl.BlockSpec((b_blk, h_pad), lambda b, t: (b, 0)),         # h0
            pl.BlockSpec((I, h_pad), lambda b, t: (0, 0)),             # V^T
            pl.BlockSpec((h_pad, h_pad), lambda b, t: (0, 0)),         # W^T
            pl.BlockSpec((1, h_pad), lambda b, t: (0, 0)),             # bias
        ],
        out_specs=pl.BlockSpec((t_chunk * b_blk, h_pad),
                               lambda b, t: (b * n_t + t, 0)),
        scratch_shapes=[
            pltpu.VMEM((b_blk, h_pad), jnp.float32),             # h carry
            pltpu.VMEM((t_chunk * b_blk, h_pad), jnp.float32),   # staged zc
        ],
    )

    h_seq2 = pl.pallas_call(
        kernel,
        out_shape=jax.ShapeDtypeStruct((n_bblk * s_pad * b_blk, h_pad),
                                       jnp.float32),
        grid_spec=grid_spec,
        compiler_params=pltpu.CompilerParams(
            dimension_semantics=("parallel", "arbitrary"),  # batch ∥, time serial
            vmem_limit_bytes=vmem_limit),
    )(x2, h0_p, vt, wt, bias)

    if n_bblk == 1 and S == s_pad and B == b_pad and H == h_pad:
        h_seq = h_seq2.reshape(S, B, H)                    # no reslice copy
    else:
        h_seq = (h_seq2.reshape(n_bblk, s_pad, b_blk, h_pad)
                 .transpose(1, 0, 2, 3)
                 .reshape(s_pad, b_pad, h_pad)[:S, :B, :H])
    h_last = h_seq[-1:]                                    # derived, no 2nd output
    return h_seq, h_last


def init_params(key, input_size, hidden_size):
    """Deterministic synthetic init mimicking nn.Linear's uniform fan-in init."""
    k1, k2, k3, k4 = jax.random.split(key, 4)
    bound_w = 1.0 / jnp.sqrt(hidden_size)
    bound_v = 1.0 / jnp.sqrt(input_size)
    return {
        "W_w": jax.random.uniform(k1, (hidden_size, hidden_size),
                                  minval=-bound_w, maxval=bound_w,
                                  dtype=jnp.float32),
        "W_b": jax.random.uniform(k2, (hidden_size,),
                                  minval=-bound_w, maxval=bound_w,
                                  dtype=jnp.float32),
        "V_w": jax.random.uniform(k3, (hidden_size, input_size),
                                  minval=-bound_v, maxval=bound_v,
                                  dtype=jnp.float32),
        "V_b": jax.random.uniform(k4, (hidden_size,),
                                  minval=-bound_v, maxval=bound_v,
                                  dtype=jnp.float32),
    }


def rnn_reference(x, params, h0=None):
    """Pure-JAX reference matching the PyTorch forward exactly (f32)."""
    S, B, I = x.shape
    H = params["W_w"].shape[0]
    h = (jnp.zeros((B, H), jnp.float32) if h0 is None
         else h0.reshape(B, H).astype(jnp.float32))
    hs = []
    for t in range(S):
        z = (x[t] @ params["V_w"].T + params["V_b"]
             + h @ params["W_w"].T + params["W_b"])
        h = jnp.tanh(z)
        hs.append(h)
    return jnp.stack(hs), h[None]


if __name__ == "__main__":
    seq_len, batch, input_size, hidden_size = 8, 2, 4, 32

    key = jax.random.PRNGKey(0)
    kx, kp, kx2, kh = jax.random.split(key, 4)
    x = jax.random.normal(kx, (seq_len, batch, input_size), dtype=jnp.float32)
    params = init_params(kp, input_size, hidden_size)

    h_seq_ref, h_last_ref = rnn_reference(x, params)

    # 1) f32 MXU escape hatch: bit-tight agreement with the reference.
    h_seq, h_last = rnn_forward(x, params, mxu_dtype=jnp.float32)
    jax.block_until_ready((h_seq, h_last))
    assert h_seq.shape == (seq_len, batch, hidden_size)
    assert h_last.shape == (1, batch, hidden_size)
    assert jnp.allclose(h_seq, h_seq_ref, atol=1e-5, rtol=1e-5)
    assert jnp.allclose(h_last, h_last_ref, atol=1e-5, rtol=1e-5)

    # 2) Default bf16-MXU path (perf default): loose tolerance vs f32 ref.
    h_seq_bf, h_last_bf = rnn_forward(x, params)
    jax.block_until_ready((h_seq_bf, h_last_bf))
    assert h_seq_bf.shape == (seq_len, batch, hidden_size)
    assert float(jnp.max(jnp.abs(h_seq_bf - h_seq_ref))) < 0.1

    # 3) Batch-blocked "parallel" grid axis + multi-chunk (padded) time grid
    #    + nonzero h0, f32 for a tight check.
    S2, B2 = 10, 16
    xb = jax.random.normal(kx2, (S2, B2, input_size), dtype=jnp.float32)
    h0 = 0.1 * jax.random.normal(kh, (1, B2, hidden_size), dtype=jnp.float32)
    ref_seq2, ref_last2 = rnn_reference(xb, params, h0)
    got_seq2, got_last2 = rnn_forward(xb, params, h0, t_chunk=4,
                                      batch_block=8, mxu_dtype=jnp.float32)
    jax.block_until_ready((got_seq2, got_last2))
    assert got_seq2.shape == (S2, B2, hidden_size)
    assert got_last2.shape == (1, B2, hidden_size)
    assert jnp.allclose(got_seq2, ref_seq2, atol=1e-5, rtol=1e-5)
    assert jnp.allclose(got_last2, ref_last2, atol=1e-5, rtol=1e-5)

    print("KERNEL_OK")
</pallas_src>

<mosaic_0001>
module attributes {stable_mosaic.version = 11 : i64} {
  func.func @_rnn_chunk_kernel(%arg0: i32, %arg1: i32, %arg2: memref<64x4xf32, #tpu.memory_space<vmem>>, %arg3: memref<8x128xf32, #tpu.memory_space<vmem>>, %arg4: memref<4x128xf32, #tpu.memory_space<vmem>>, %arg5: memref<128x128xf32, #tpu.memory_space<vmem>>, %arg6: memref<1x128xf32, #tpu.memory_space<vmem>>, %arg7: memref<64x128xf32, #tpu.memory_space<vmem>>, %arg8: memref<8x128xf32, #tpu.memory_space<vmem>>, %arg9: memref<64x128xf32, #tpu.memory_space<vmem>>) attributes {dimension_semantics = [#tpu.dimension_semantics<parallel>, #tpu.dimension_semantics<arbitrary>], iteration_bounds = array<i64: 1, 1>, scalar_prefetch = 0 : i64, scratch_operands = 2 : i64, tpu.core_type = #tpu.core_type<tc>, window_params = [{transform_indices = @transform_0, window_bounds = array<i64: 64, 4>}, {transform_indices = @transform_1, window_bounds = array<i64: 8, 128>}, {pipeline_mode = #tpu.pipeline_mode<synchronous>, transform_indices = @transform_2, window_bounds = array<i64: 4, 128>}, {pipeline_mode = #tpu.pipeline_mode<synchronous>, transform_indices = @transform_3, window_bounds = array<i64: 128, 128>}, {pipeline_mode = #tpu.pipeline_mode<synchronous>, transform_indices = @transform_4, window_bounds = array<i64: 1, 128>}, {transform_indices = @transform_5, window_bounds = array<i64: 64, 128>}]} {
    %c0_i32 = arith.constant 0 : i32
    %0 = arith.cmpi eq, %arg1, %c0_i32 : i32
    %1 = arith.extui %0 : i1 to i32
    %c0_i32_0 = arith.constant 0 : i32
    %2 = arith.cmpi ne, %1, %c0_i32_0 : i32
    scf.if %2 {
      %c0_47 = arith.constant 0 : index
      %c0_48 = arith.constant 0 : index
      %85 = vector.load %arg3[%c0_47, %c0_48] : memref<8x128xf32, #tpu.memory_space<vmem>>, vector<8x128xf32>
      %c0_49 = arith.constant 0 : index
      %c0_50 = arith.constant 0 : index
      %86 = vector.load %arg8[%c0_49, %c0_50] : memref<8x128xf32, #tpu.memory_space<vmem>>, vector<8x128xf32>
      tpu.vector_store %arg8[%c0_49, %c0_50], %85 {strides = array<i32>} : memref<8x128xf32, #tpu.memory_space<vmem>>, vector<8x128xf32>,
    } else {
    }
    %c0 = arith.constant 0 : index
    %c0_1 = arith.constant 0 : index
    %3 = vector.load %arg2[%c0, %c0_1] : memref<64x4xf32, #tpu.memory_space<vmem>>, vector<64x4xf32>
    %c0_2 = arith.constant 0 : index
    %c0_3 = arith.constant 0 : index
    %4 = vector.load %arg4[%c0_2, %c0_3] : memref<4x128xf32, #tpu.memory_space<vmem>>, vector<4x128xf32>
    %cst = arith.constant dense<0.000000e+00> : vector<64x128xf32>
    %5 = tpu.matmul %3, %4, %cst {dimension_numbers = #tpu.dot_dimension_numbers<[1], [0], [0], [1], [0, 0, 1, 1], [], []>} : vector<64x4xf32>, vector<4x128xf32>, vector<64x128xf32> -> vector<64x128xf32>
    %c0_4 = arith.constant 0 : index
    %c0_5 = arith.constant 0 : index
    %6 = vector.load %arg6[%c0_4, %c0_5] : memref<1x128xf32, #tpu.memory_space<vmem>>, vector<1x128xf32>
    %7 = vector.broadcast %6 : vector<1x128xf32> to vector<64x128xf32>
    %8 = arith.addf %5, %7 : vector<64x128xf32>
    %c0_6 = arith.constant 0 : index
    %c0_7 = arith.constant 0 : index
    %9 = vector.load %arg9[%c0_6, %c0_7] : memref<64x128xf32, #tpu.memory_space<vmem>>, vector<64x128xf32>
    tpu.vector_store %arg9[%c0_6, %c0_7], %8 {strides = array<i32>} : memref<64x128xf32, #tpu.memory_space<vmem>>, vector<64x128xf32>,
    %c0_8 = arith.constant 0 : index
    %c0_9 = arith.constant 0 : index
    %10 = vector.load %arg5[%c0_8, %c0_9] : memref<128x128xf32, #tpu.memory_space<vmem>>, vector<128x128xf32>
    %c0_10 = arith.constant 0 : index
    %c0_11 = arith.constant 0 : index
    %11 = vector.load %arg8[%c0_10, %c0_11] : memref<8x128xf32, #tpu.memory_space<vmem>>, vector<8x128xf32>
    %c0_i32_12 = arith.constant 0 : i32
    %c8_i32 = arith.constant 8 : i32
    %12 = arith.muli %c0_i32_12, %c8_i32 : i32
    %13 = tpu.assume_multiple %12, 8 : i32
    %14 = arith.index_cast %13 : i32 to index
    %c0_13 = arith.constant 0 : index
    %15 = vector.load %arg9[%14, %c0_13] : memref<64x128xf32, #tpu.memory_space<vmem>>, vector<8x128xf32>
    %cst_14 = arith.constant dense<0.000000e+00> : vector<8x128xf32>
    %16 = tpu.matmul %11, %10, %cst_14 {dimension_numbers = #tpu.dot_dimension_numbers<[1], [0], [0], [1], [0, 0, 1, 1], [], []>} : vector<8x128xf32>, vector<128x128xf32>, vector<8x128xf32> -> vector<8x128xf32>
    %17 = arith.addf %15, %16 : vector<8x128xf32>
    %18 = math.tanh %17 : vector<8x128xf32>
    %19 = arith.index_cast %13 : i32 to index
    %c0_15 = arith.constant 0 : index
    %20 = vector.load %arg7[%19, %c0_15] : memref<64x128xf32, #tpu.memory_space<vmem>>, vector<8x128xf32>
    tpu.vector_store %arg7[%19, %c0_15], %18 {strides = array<i32>} : memref<64x128xf32, #tpu.memory_space<vmem>>, vector<8x128xf32>,
    %c1_i32 = arith.constant 1 : i32
    %c8_i32_16 = arith.constant 8 : i32
    %21 = arith.muli %c1_i32, %c8_i32_16 : i32
    %22 = tpu.assume_multiple %21, 8 : i32
    %23 = arith.index_cast %22 : i32 to index
    %c0_17 = arith.constant 0 : index
    %24 = vector.load %arg9[%23, %c0_17] : memref<64x128xf32, #tpu.memory_space<vmem>>, vector<8x128xf32>
    %cst_18 = arith.constant dense<0.000000e+00> : vector<8x128xf32>
    %25 = tpu.matmul %18, %10, %cst_18 {dimension_numbers = #tpu.dot_dimension_numbers<[1], [0], [0], [1], [0, 0, 1, 1], [], []>} : vector<8x128xf32>, vector<128x128xf32>, vector<8x128xf32> -> vector<8x128xf32>
    %26 = arith.addf %24, %25 : vector<8x128xf32>
    %27 = math.tanh %26 : vector<8x128xf32>
    %28 = arith.index_cast %22 : i32 to index
    %c0_19 = arith.constant 0 : index
    %29 = vector.load %arg7[%28, %c0_19] : memref<64x128xf32, #tpu.memory_space<vmem>>, vector<8x128xf32>
    tpu.vector_store %arg7[%28, %c0_19], %27 {strides = array<i32>} : memref<64x128xf32, #tpu.memory_space<vmem>>, vector<8x128xf32>,
    %c2_i32 = arith.constant 2 : i32
    %c8_i32_20 = arith.constant 8 : i32
    %30 = arith.muli %c2_i32, %c8_i32_20 : i32
    %31 = tpu.assume_multiple %30, 8 : i32
    %32 = arith.index_cast %31 : i32 to index
    %c0_21 = arith.constant 0 : index
    %33 = vector.load %arg9[%32, %c0_21] : memref<64x128xf32, #tpu.memory_space<vmem>>, vector<8x128xf32>
    %cst_22 = arith.constant dense<0.000000e+00> : vector<8x128xf32>
    %34 = tpu.matmul %27, %10, %cst_22 {dimension_numbers = #tpu.dot_dimension_numbers<[1], [0], [0], [1], [0, 0, 1, 1], [], []>} : vector<8x128xf32>, vector<128x128xf32>, vector<8x128xf32> -> vector<8x128xf32>
    %35 = arith.addf %33, %34 : vector<8x128xf32>
    %36 = math.tanh %35 : vector<8x128xf32>
    %37 = arith.index_cast %31 : i32 to index
    %c0_23 = arith.constant 0 : index
    %38 = vector.load %arg7[%37, %c0_23] : memref<64x128xf32, #tpu.memory_space<vmem>>, vector<8x128xf32>
    tpu.vector_store %arg7[%37, %c0_23], %36 {strides = array<i32>} : memref<64x128xf32, #tpu.memory_space<vmem>>, vector<8x128xf32>,
    %c3_i32 = arith.constant 3 : i32
    %c8_i32_24 = arith.constant 8 : i32
    %39 = arith.muli %c3_i32, %c8_i32_24 : i32
    %40 = tpu.assume_multiple %39, 8 : i32
    %41 = arith.index_cast %40 : i32 to index
    %c0_25 = arith.constant 0 : index
    %42 = vector.load %arg9[%41, %c0_25] : memref<64x128xf32, #tpu.memory_space<vmem>>, vector<8x128xf32>
    %cst_26 = arith.constant dense<0.000000e+00> : vector<8x128xf32>
    %43 = tpu.matmul %36, %10, %cst_26 {dimension_numbers = #tpu.dot_dimension_numbers<[1], [0], [0], [1], [0, 0, 1, 1], [], []>} : vector<8x128xf32>, vector<128x128xf32>, vector<8x128xf32> -> vector<8x128xf32>
    %44 = arith.addf %42, %43 : vector<8x128xf32>
    %45 = math.tanh %44 : vector<8x128xf32>
    %46 = arith.index_cast %40 : i32 to index
    %c0_27 = arith.constant 0 : index
    %47 = vector.load %arg7[%46, %c0_27] : memref<64x128xf32, #tpu.memory_space<vmem>>, vector<8x128xf32>
    tpu.vector_store %arg7[%46, %c0_27], %45 {strides = array<i32>} : memref<64x128xf32, #tpu.memory_space<vmem>>, vector<8x128xf32>,
    %c4_i32 = arith.constant 4 : i32
    %c8_i32_28 = arith.constant 8 : i32
    %48 = arith.muli %c4_i32, %c8_i32_28 : i32
    %49 = tpu.assume_multiple %48, 8 : i32
    %50 = arith.index_cast %49 : i32 to index
    %c0_29 = arith.constant 0 : index
    %51 = vector.load %arg9[%50, %c0_29] : memref<64x128xf32, #tpu.memory_space<vmem>>, vector<8x128xf32>
    %cst_30 = arith.constant dense<0.000000e+00> : vector<8x128xf32>
    %52 = tpu.matmul %45, %10, %cst_30 {dimension_numbers = #tpu.dot_dimension_numbers<[1], [0], [0], [1], [0, 0, 1, 1], [], []>} : vector<8x128xf32>, vector<128x128xf32>, vector<8x128xf32> -> vector<8x128xf32>
    %53 = arith.addf %51, %52 : vector<8x128xf32>
    %54 = math.tanh %53 : vector<8x128xf32>
    %55 = arith.index_cast %49 : i32 to index
    %c0_31 = arith.constant 0 : index
    %56 = vector.load %arg7[%55, %c0_31] : memref<64x128xf32, #tpu.memory_space<vmem>>, vector<8x128xf32>
    tpu.vector_store %arg7[%55, %c0_31], %54 {strides = array<i32>} : memref<64x128xf32, #tpu.memory_space<vmem>>, vector<8x128xf32>,
    %c5_i32 = arith.constant 5 : i32
    %c8_i32_32 = arith.constant 8 : i32
    %57 = arith.muli %c5_i32, %c8_i32_32 : i32
    %58 = tpu.assume_multiple %57, 8 : i32
    %59 = arith.index_cast %58 : i32 to index
    %c0_33 = arith.constant 0 : index
    %60 = vector.load %arg9[%59, %c0_33] : memref<64x128xf32, #tpu.memory_space<vmem>>, vector<8x128xf32>
    %cst_34 = arith.constant dense<0.000000e+00> : vector<8x128xf32>
    %61 = tpu.matmul %54, %10, %cst_34 {dimension_numbers = #tpu.dot_dimension_numbers<[1], [0], [0], [1], [0, 0, 1, 1], [], []>} : vector<8x128xf32>, vector<128x128xf32>, vector<8x128xf32> -> vector<8x128xf32>
    %62 = arith.addf %60, %61 : vector<8x128xf32>
    %63 = math.tanh %62 : vector<8x128xf32>
    %64 = arith.index_cast %58 : i32 to index
    %c0_35 = arith.constant 0 : index
    %65 = vector.load %arg7[%64, %c0_35] : memref<64x128xf32, #tpu.memory_space<vmem>>, vector<8x128xf32>
    tpu.vector_store %arg7[%64, %c0_35], %63 {strides = array<i32>} : memref<64x128xf32, #tpu.memory_space<vmem>>, vector<8x128xf32>,
    %c6_i32 = arith.constant 6 : i32
    %c8_i32_36 = arith.constant 8 : i32
    %66 = arith.muli %c6_i32, %c8_i32_36 : i32
    %67 = tpu.assume_multiple %66, 8 : i32
    %68 = arith.index_cast %67 : i32 to index
    %c0_37 = arith.constant 0 : index
    %69 = vector.load %arg9[%68, %c0_37] : memref<64x128xf32, #tpu.memory_space<vmem>>, vector<8x128xf32>
    %cst_38 = arith.constant dense<0.000000e+00> : vector<8x128xf32>
    %70 = tpu.matmul %63, %10, %cst_38 {dimension_numbers = #tpu.dot_dimension_numbers<[1], [0], [0], [1], [0, 0, 1, 1], [], []>} : vector<8x128xf32>, vector<128x128xf32>, vector<8x128xf32> -> vector<8x128xf32>
    %71 = arith.addf %69, %70 : vector<8x128xf32>
    %72 = math.tanh %71 : vector<8x128xf32>
    %73 = arith.index_cast %67 : i32 to index
    %c0_39 = arith.constant 0 : index
    %74 = vector.load %arg7[%73, %c0_39] : memref<64x128xf32, #tpu.memory_space<vmem>>, vector<8x128xf32>
    tpu.vector_store %arg7[%73, %c0_39], %72 {strides = array<i32>} : memref<64x128xf32, #tpu.memory_space<vmem>>, vector<8x128xf32>,
    %c7_i32 = arith.constant 7 : i32
    %c8_i32_40 = arith.constant 8 : i32
    %75 = arith.muli %c7_i32, %c8_i32_40 : i32
    %76 = tpu.assume_multiple %75, 8 : i32
    %77 = arith.index_cast %76 : i32 to index
    %c0_41 = arith.constant 0 : index
    %78 = vector.load %arg9[%77, %c0_41] : memref<64x128xf32, #tpu.memory_space<vmem>>, vector<8x128xf32>
    %cst_42 = arith.constant dense<0.000000e+00> : vector<8x128xf32>
    %79 = tpu.matmul %72, %10, %cst_42 {dimension_numbers = #tpu.dot_dimension_numbers<[1], [0], [0], [1], [0, 0, 1, 1], [], []>} : vector<8x128xf32>, vector<128x128xf32>, vector<8x128xf32> -> vector<8x128xf32>
    %80 = arith.addf %78, %79 : vector<8x128xf32>
    %81 = math.tanh %80 : vector<8x128xf32>
    %82 = arith.index_cast %76 : i32 to index
    %c0_43 = arith.constant 0 : index
    %83 = vector.load %arg7[%82, %c0_43] : memref<64x128xf32, #tpu.memory_space<vmem>>, vector<8x128xf32>
    tpu.vector_store %arg7[%82, %c0_43], %81 {strides = array<i32>} : memref<64x128xf32, #tpu.memory_space<vmem>>, vector<8x128xf32>,
    %c8_i32_44 = arith.constant 8 : i32
    %c0_45 = arith.constant 0 : index
    %c0_46 = arith.constant 0 : index
    %84 = vector.load %arg8[%c0_45, %c0_46] : memref<8x128xf32, #tpu.memory_space<vmem>>, vector<8x128xf32>
    tpu.vector_store %arg8[%c0_45, %c0_46], %81 {strides = array<i32>} : memref<8x128xf32, #tpu.memory_space<vmem>>, vector<8x128xf32>,
    return
  }
  func.func @transform_0(%arg0: i32, %arg1: i32) -> (i32, i32) {
    %c1_i32 = arith.constant 1 : i32
    %0 = arith.muli %arg0, %c1_i32 : i32
    %1 = arith.addi %0, %arg1 : i32
    %c0_i32 = arith.constant 0 : i32
    %c0_i32_0 = arith.constant 0 : i32
    return %1, %c0_i32 : i32, i32
  }
  func.func @transform_1(%arg0: i32, %arg1: i32) -> (i32, i32) {
    %c0_i32 = arith.constant 0 : i32
    %c0_i32_0 = arith.constant 0 : i32
    return %arg0, %c0_i32 : i32, i32
  }
  func.func @transform_2(%arg0: i32, %arg1: i32) -> (i32, i32) {
    %c0_i32 = arith.constant 0 : i32
    %c0_i32_0 = arith.constant 0 : i32
    %c0_i32_1 = arith.constant 0 : i32
    return %c0_i32, %c0_i32_0 : i32, i32
  }
  func.func @transform_3(%arg0: i32, %arg1: i32) -> (i32, i32) {
    %c0_i32 = arith.constant 0 : i32
    %c0_i32_0 = arith.constant 0 : i32
    %c0_i32_1 = arith.constant 0 : i32
    return %c0_i32, %c0_i32_0 : i32, i32
  }
  func.func @transform_4(%arg0: i32, %arg1: i32) -> (i32, i32) {
    %c0_i32 = arith.constant 0 : i32
    %c0_i32_0 = arith.constant 0 : i32
    %c0_i32_1 = arith.constant 0 : i32
    return %c0_i32, %c0_i32_0 : i32, i32
  }
  func.func @transform_5(%arg0: i32, %arg1: i32) -> (i32, i32) {
    %c1_i32 = arith.constant 1 : i32
    %0 = arith.muli %arg0, %c1_i32 : i32
    %1 = arith.addi %0, %arg1 : i32
    %c0_i32 = arith.constant 0 : i32
    %c0_i32_0 = arith.constant 0 : i32
    return %1, %c0_i32 : i32, i32
  }
}

</mosaic_0001>

<llo_original>
// kernel: tpu_custom_call.1
$region0: #{tpu_custom_call.1}
  #allocation0 [shape = 'u32[]', space=smem, size = 0x4, offset = 0x4, fixed_abs, tag = 'smem constant byte address 0x4 - core index']
  #allocation1 [shape = 'u32[72,128]{1,0:T(1,128)}', space=vmem, size = 0x9000, scoped, tag = 'internal scratch']
  #allocation2 [shape = 'f32[8,128]{1,0:T(8,128)}', space=vmem, size = 0x1000, scoped, tag = 'scratch operand']
  #allocation3 [shape = 'f32[64,128]{1,0:T(8,128)}', space=vmem, size = 0x8000, scoped, tag = 'scratch operand']
  %s0 = inlined_call_operand.vmem [shape: f32[64,4], index: 0, kind: input, shape index: {}]
  %s1 = inlined_call_operand.vmem [shape: f32[8,128], index: 1, kind: input, shape index: {}]
  %s2 = inlined_call_operand.vmem [shape: f32[4,128], index: 2, kind: input, shape index: {}]
  %s3 = inlined_call_operand.hbm [shape: f32[128,128], index: 3, kind: input, shape index: {}]
  %s4 = inlined_call_operand.vmem [shape: f32[1,128], index: 4, kind: input, shape index: {}]
  %s5 = inlined_call_operand.hbm [shape: f32[64,128], index: 5, kind: output, shape index: {}]
  %s6 = sld [smem:[#allocation0]]
  $region38: #{tpu_custom_call.1} parent=0
    _
  %s8 = ssub.s32 1, %s6
  %s9 = scalar_select 0, %s8, %s6
  $region1: #{tpu_custom_call.1} parent=0
    #allocation4 [shape = 'u8[65536]{0}', space=vmem, size = 0x10000, scoped, tag = 'input window, operand 3, single buffered']
    #allocation5 [shape = 's32[1]{0}', space=sflag, size = 0x4, scoped, tag = 'scoped memory for tpu_custom_call.1']
    #allocation6 [shape = 's32[1]{0}', space=sflag, size = 0x4, scoped, tag = 'scoped memory for tpu_custom_call.1']
    #allocation7 [shape = 'u8[32768]{0}', space=vmem, size = 0x8000, scoped, tag = 'output window, operand 0, single buffered']
    %10 = vsyncpa [#allocation5], 0
    %11 = vsyncpa [#allocation6], 0
    // Predicated region
    $region2: #{tpu_custom_call.1} parent=1 // pred_check
      _
    $region3: #{tpu_custom_call.1} parent=1 // pred_check_branch
      %13 = sbr.rel (0) target = $region5
    $region4: #{tpu_custom_call.1} parent=1 // pred_region
      %s14 = sadd.s32 0, 0
      %s15 = smul.u32 8, %s14
      %p16 = scmp.lt.s32.totalorder %s15, 7
      %s17 = scalar_select %p16, %s15, 7
      %s18 = smul.addr %s17, 8
      %s19 = scalar_lea.vmem %s0, %s18
      %s20 = sadd.s32 0, 0
      %s21 = smul.u32 8, %s20
    $region5: #{tpu_custom_call.1} parent=1 // pred_fallthru
      _
    // Predicated region
    $region6: #{tpu_custom_call.1} parent=1 // pred_check
      _
    $region7: #{tpu_custom_call.1} parent=1 // pred_check_branch
      %23 = sbr.rel (0) target = $region9
    $region8: #{tpu_custom_call.1} parent=1 // pred_region
      _
    $region9: #{tpu_custom_call.1} parent=1 // pred_fallthru
      _
    // Predicated region
    $region10: #{tpu_custom_call.1} parent=1 // pred_check
      _
    $region11: #{tpu_custom_call.1} parent=1 // pred_check_branch
      %25 = sbr.rel (0) target = $region13
    $region12: #{tpu_custom_call.1} parent=1 // pred_region
      _
    $region13: #{tpu_custom_call.1} parent=1 // pred_fallthru
      _
    // Predicated region
    $region14: #{tpu_custom_call.1} parent=1 // pred_check
      _
    $region15: #{tpu_custom_call.1} parent=1 // pred_check_branch
      %27 = sbr.rel (0) target = $region17
    $region16: #{tpu_custom_call.1} parent=1 // pred_region
      %29 = vsyncadd [#allocation5], 0
      %s30 = sshll.u32 %s3, 4
      %s31 = int_to_ptr.hbm [resolvable:$true] %s30
      %s32 = sshll.u32 [#allocation4], 4
      %s33 = int_to_ptr.vmem [resolvable:$true] %s32
      %38 = dma.hbm_to_vmem [thread:$0]  %s31, 2048, %s33, [#allocation5], 128, 128, 8
    $region17: #{tpu_custom_call.1} parent=1 // pred_fallthru
      _
    // Predicated region
    $region18: #{tpu_custom_call.1} parent=1 // pred_check
      _
    $region19: #{tpu_custom_call.1} parent=1 // pred_check_branch
      %40 = sbr.rel (0) target = $region21
    $region20: #{tpu_custom_call.1} parent=1 // pred_region
      _
    $region21: #{tpu_custom_call.1} parent=1 // pred_fallthru
      _
    // Predicated region
    $region22: #{tpu_custom_call.1} parent=1 // pred_check
      _
    $region23: #{tpu_custom_call.1} parent=1 // pred_check_branch
      %42 = sbr.rel (0) target = $region25
    $region24: #{tpu_custom_call.1} parent=1 // pred_region
      %44 = dma.done [#allocation5], 2048
    $region25: #{tpu_custom_call.1} parent=1 // pred_fallthru
      _
    %s45 = sadd.s32 0, 0
    %s46 = smul.u32 8, %s45
    %p47 = scmp.lt.s32.totalorder %s46, 7
    %s48 = scalar_select %p47, %s46, 7
    %s49 = smul.addr %s48, 8
    %s50 = scalar_lea.vmem %s0, %s49
    %s51 = sadd.s32 0, 0
    %s52 = smul.u32 8, %s51
    %p53 = scmp.lt.s32.totalorder %s52, 7
    %s54 = scalar_select %p53, %s52, 7
    %s55 = smul.addr %s54, 8
    %s56 = scalar_lea.vmem %s0, %s55
    %s57 = sadd.s32 0, 0
    %s58 = smul.u32 8, %s57
    %s59 = sadd.s32 0, 0
    %s60 = smul.u32 8, %s59
    %p61 = scmp.eq.s32.totalorder 0, 0
    // Predicated region
    $region26: #{tpu_custom_call.1} parent=1 // pred_check
      %p62 = pneg %p61
    $region27: #{tpu_custom_call.1} parent=1 // pred_check_branch
      %64 = sbr.rel (%p62) target = $region29
    $region28: #{tpu_custom_call.1} parent=1 // pred_region
      %v65 = vld [vmem:[%s1] sm:$0xff]
      %66 = vst [vmem:[#allocation2] sm:$0xff] %v65
    $region29: #{tpu_custom_call.1} parent=1 // pred_fallthru
      _
    %v67 = vld [vmem:[%s56] sm:$0xff]
    %v68 = vld [vmem:[%s56 + $0x8] sm:$0xff]
    %v69 = vld [vmem:[%s56 + $0x10] sm:$0xff]
    %v70 = vld [vmem:[%s56 + $0x18] sm:$0xff]
    %v71 = vld [vmem:[%s56 + $0x20] sm:$0xff]
    %v72 = vld [vmem:[%s56 + $0x28] sm:$0xff]
    %v73 = vld [vmem:[%s56 + $0x30] sm:$0xff]
    %v74 = vld [vmem:[%s56 + $0x38] sm:$0xff]
    %v75 = vld [vmem:[%s2] sm:$0xf]
    %v76 = vld [vmem:[%s4] sm:$0x1]
    %v78 = vperm.slane %v76, 0
    %vm80 = vcmask 31744
    %v82 = vsel %vm80, %v67, 0
    %v85 = vsel %vm80, %v68, 0
    %v88 = vsel %vm80, %v69, 0
    %v91 = vsel %vm80, %v70, 0
    %v94 = vsel %vm80, %v71, 0
    %v97 = vsel %vm80, %v72, 0
    %v100 = vsel %vm80, %v73, 0
    %v103 = vsel %vm80, %v74, 0
    %vm105 = vcmask 1043456
    %v107 = vsel %vm105, %v75, 0
    %109 = vmatpush.msra.mxu0 0.0
    %110 = vmatpush.msra.mxu0 0.0
    %111 = vmatpush.msra.mxu0 0.0
    %112 = vmatpush.msra.mxu0 0.0
    %113 = vmatpush.msra.mxu0 0.0
    %114 = vmatpush.msra.mxu0 0.0
    %115 = vmatpush.msra.mxu0 0.0
    %116 = vmatpush.msra.mxu0 0.0
    %117 = vmatpush.msra.mxu0 0.0
    %118 = vmatpush.msra.mxu0 0.0
    %119 = vmatpush.msra.mxu0 0.0
    %120 = vmatpush.msra.mxu0 0.0
    %121 = vmatpush.msra.mxu0 0.0
    %122 = vmatpush.msra.mxu0 0.0
    %123 = vmatpush.msra.mxu0 0.0
    %124 = vmatpush.msra.mxu0 %v107
    %125 = vmatmul.f32.gmra.mxu0 %v82
    %v126 = vpop.f32.mrf.mxu0
    %v127 = vadd.f32 %v78, %v126
    %128 = vmatmul.f32.gmra.mxu0 %v85
    %v129 = vpop.f32.mrf.mxu0
    %v130 = vadd.f32 %v78, %v129
    %131 = vmatmul.f32.gmra.mxu0 %v88
    %v132 = vpop.f32.mrf.mxu0
    %v133 = vadd.f32 %v78, %v132
    %134 = vmatmul.f32.gmra.mxu0 %v91
    %v135 = vpop.f32.mrf.mxu0
    %v136 = vadd.f32 %v78, %v135
    %137 = vmatmul.f32.gmra.mxu0 %v94
    %v138 = vpop.f32.mrf.mxu0
    %v139 = vadd.f32 %v78, %v138
    %140 = vmatmul.f32.gmra.mxu0 %v97
    %v141 = vpop.f32.mrf.mxu0
    %v142 = vadd.f32 %v78, %v141
    %143 = vmatmul.f32.gmra.mxu0 %v100
    %v144 = vpop.f32.mrf.mxu0
    %v145 = vadd.f32 %v78, %v144
    %146 = vmatmul.f32.gmra.mxu0 %v103
    %v147 = vpop.f32.mrf.mxu0
    %v148 = vadd.f32 %v78, %v147
    %149 = vdwg.mxu0
    %150 = vst [vmem:[#allocation3] sm:$0xff] %v127
    %151 = vst [vmem:[#allocation3 + $0x8] sm:$0xff] %v130
    %152 = vst [vmem:[#allocation3 + $0x10] sm:$0xff] %v133
    %153 = vst [vmem:[#allocation3 + $0x18] sm:$0xff] %v136
    %154 = vst [vmem:[#allocation3 + $0x20] sm:$0xff] %v139
    %155 = vst [vmem:[#allocation3 + $0x28] sm:$0xff] %v142
    %156 = vst [vmem:[#allocation3 + $0x30] sm:$0xff] %v145
    %157 = vst [vmem:[#allocation3 + $0x38] sm:$0xff] %v148
    %v158 = vld [vmem:[#allocation4] sm:$0xff]
    %v159 = vld [vmem:[#allocation4 + $0x8] sm:$0xff]
    %v160 = vld [vmem:[#allocation4 + $0x10] sm:$0xff]
    %v161 = vld [vmem:[#allocation4 + $0x18] sm:$0xff]
    %v162 = vld [vmem:[#allocation4 + $0x20] sm:$0xff]
    %v163 = vld [vmem:[#allocation4 + $0x28] sm:$0xff]
    %v164 = vld [vmem:[#allocation4 + $0x30] sm:$0xff]
    %v165 = vld [vmem:[#allocation4 + $0x38] sm:$0xff]
    %v166 = vld [vmem:[#allocation4 + $0x40] sm:$0xff]
    %v167 = vld [vmem:[#allocation4 + $0x48] sm:$0xff]
    %v168 = vld [vmem:[#allocation4 + $0x50] sm:$0xff]
    %v169 = vld [vmem:[#allocation4 + $0x58] sm:$0xff]
    %v170 = vld [vmem:[#allocation4 + $0x60] sm:$0xff]
    %v171 = vld [vmem:[#allocation4 + $0x68] sm:$0xff]
    %v172 = vld [vmem:[#allocation4 + $0x70] sm:$0xff]
    %v173 = vld [vmem:[#allocation4 + $0x78] sm:$0xff]
    %v174 = vld [vmem:[#allocation2] sm:$0xff]
    %v175 = vld [vmem:[#allocation3] sm:$0xff]
    %176 = vmatpush.msra.mxu0 %v173
    %177 = vmatpush.msra.mxu0 %v172
    %178 = vmatpush.msra.mxu0 %v171
    %179 = vmatpush.msra.mxu0 %v170
    %180 = vmatpush.msra.mxu0 %v169
    %181 = vmatpush.msra.mxu0 %v168
    %182 = vmatpush.msra.mxu0 %v167
    %183 = vmatpush.msra.mxu0 %v166
    %184 = vmatpush.msra.mxu0 %v165
    %185 = vmatpush.msra.mxu0 %v164
    %186 = vmatpush.msra.mxu0 %v163
    %187 = vmatpush.msra.mxu0 %v162
    %188 = vmatpush.msra.mxu0 %v161
    %189 = vmatpush.msra.mxu0 %v160
    %190 = vmatpush.msra.mxu0 %v159
    %191 = vmatpush.msra.mxu0 %v158
    %192 = vmatmul.f32.gmra.mxu0 %v174
    %v193 = vpop.f32.mrf.mxu0
    %v194 = vadd.f32 0.0, %v193
    %195 = vdwg.mxu0
    %v196 = vadd.f32 %v175, %v194
    %v197 = vtanh.pop %v196
    %198 = vst [vmem:[#allocation7] sm:$0xff] %v197
    %s199 = scalar_lea.vmem [#allocation3], 8
    %v200 = vld [vmem:[%s199] sm:$0xff]
    %201 = vmatpush.msra.mxu0 %v173
    %202 = vmatpush.msra.mxu0 %v172
    %203 = vmatpush.msra.mxu0 %v171
    %204 = vmatpush.msra.mxu0 %v170
    %205 = vmatpush.msra.mxu0 %v169
    %206 = vmatpush.msra.mxu0 %v168
    %207 = vmatpush.msra.mxu0 %v167
    %208 = vmatpush.msra.mxu0 %v166
    %209 = vmatpush.msra.mxu0 %v165
    %210 = vmatpush.msra.mxu0 %v164
    %211 = vmatpush.msra.mxu0 %v163
    %212 = vmatpush.msra.mxu0 %v162
    %213 = vmatpush.msra.mxu0 %v161
    %214 = vmatpush.msra.mxu0 %v160
    %215 = vmatpush.msra.mxu0 %v159
    %216 = vmatpush.msra.mxu0 %v158
    %217 = vmatmul.f32.gmra.mxu0 %v197
    %v218 = vpop.f32.mrf.mxu0
    %v219 = vadd.f32 0.0, %v218
    %220 = vdwg.mxu0
    %v221 = vadd.f32 %v200, %v219
    %v222 = vtanh.pop %v221
    %s223 = scalar_lea.vmem [#allocation7], 8
    %224 = vst [vmem:[%s223] sm:$0xff] %v222
    %s225 = scalar_lea.vmem [#allocation3], 16
    %v226 = vld [vmem:[%s225] sm:$0xff]
    %227 = vmatpush.msra.mxu0 %v173
    %228 = vmatpush.msra.mxu0 %v172
    %229 = vmatpush.msra.mxu0 %v171
    %230 = vmatpush.msra.mxu0 %v170
    %231 = vmatpush.msra.mxu0 %v169
    %232 = vmatpush.msra.mxu0 %v168
    %233 = vmatpush.msra.mxu0 %v167
    %234 = vmatpush.msra.mxu0 %v166
    %235 = vmatpush.msra.mxu0 %v165
    %236 = vmatpush.msra.mxu0 %v164
    %237 = vmatpush.msra.mxu0 %v163
    %238 = vmatpush.msra.mxu0 %v162
    %239 = vmatpush.msra.mxu0 %v161
    %240 = vmatpush.msra.mxu0 %v160
    %241 = vmatpush.msra.mxu0 %v159
    %242 = vmatpush.msra.mxu0 %v158
    %243 = vmatmul.f32.gmra.mxu0 %v222
    %v244 = vpop.f32.mrf.mxu0
    %v245 = vadd.f32 0.0, %v244
    %246 = vdwg.mxu0
    %v247 = vadd.f32 %v226, %v245
    %v248 = vtanh.pop %v247
    %s249 = scalar_lea.vmem [#allocation7], 16
    %250 = vst [vmem:[%s249] sm:$0xff] %v248
    %s251 = scalar_lea.vmem [#allocation3], 24
    %v252 = vld [vmem:[%s251] sm:$0xff]
    %253 = vmatpush.msra.mxu0 %v173
    %254 = vmatpush.msra.mxu0 %v172
    %255 = vmatpush.msra.mxu0 %v171
    %256 = vmatpush.msra.mxu0 %v170
    %257 = vmatpush.msra.mxu0 %v169
    %258 = vmatpush.msra.mxu0 %v168
    %259 = vmatpush.msra.mxu0 %v167
    %260 = vmatpush.msra.mxu0 %v166
    %261 = vmatpush.msra.mxu0 %v165
    %262 = vmatpush.msra.mxu0 %v164
    %263 = vmatpush.msra.mxu0 %v163
    %264 = vmatpush.msra.mxu0 %v162
    %265 = vmatpush.msra.mxu0 %v161
    %266 = vmatpush.msra.mxu0 %v160
    %267 = vmatpush.msra.mxu0 %v159
    %268 = vmatpush.msra.mxu0 %v158
    %269 = vmatmul.f32.gmra.mxu0 %v248
    %v270 = vpop.f32.mrf.mxu0
    %v271 = vadd.f32 0.0, %v270
    %272 = vdwg.mxu0
    %v273 = vadd.f32 %v252, %v271
    %v274 = vtanh.pop %v273
    %s275 = scalar_lea.vmem [#allocation7], 24
    %276 = vst [vmem:[%s275] sm:$0xff] %v274
    %s277 = scalar_lea.vmem [#allocation3], 32
    %v278 = vld [vmem:[%s277] sm:$0xff]
    %279 = vmatpush.msra.mxu0 %v173
    %280 = vmatpush.msra.mxu0 %v172
    %281 = vmatpush.msra.mxu0 %v171
    %282 = vmatpush.msra.mxu0 %v170
    %283 = vmatpush.msra.mxu0 %v169
    %284 = vmatpush.msra.mxu0 %v168
    %285 = vmatpush.msra.mxu0 %v167
    %286 = vmatpush.msra.mxu0 %v166
    %287 = vmatpush.msra.mxu0 %v165
    %288 = vmatpush.msra.mxu0 %v164
    %289 = vmatpush.msra.mxu0 %v163
    %290 = vmatpush.msra.mxu0 %v162
    %291 = vmatpush.msra.mxu0 %v161
    %292 = vmatpush.msra.mxu0 %v160
    %293 = vmatpush.msra.mxu0 %v159
    %294 = vmatpush.msra.mxu0 %v158
    %295 = vmatmul.f32.gmra.mxu0 %v274
    %v296 = vpop.f32.mrf.mxu0
    %v297 = vadd.f32 0.0, %v296
    %298 = vdwg.mxu0
    %v299 = vadd.f32 %v278, %v297
    %v300 = vtanh.pop %v299
    %s301 = scalar_lea.vmem [#allocation7], 32
    %302 = vst [vmem:[%s301] sm:$0xff] %v300
    %s303 = scalar_lea.vmem [#allocation3], 40
    %v304 = vld [vmem:[%s303] sm:$0xff]
    %305 = vmatpush.msra.mxu0 %v173
    %306 = vmatpush.msra.mxu0 %v172
    %307 = vmatpush.msra.mxu0 %v171
    %308 = vmatpush.msra.mxu0 %v170
    %309 = vmatpush.msra.mxu0 %v169
    %310 = vmatpush.msra.mxu0 %v168
    %311 = vmatpush.msra.mxu0 %v167
    %312 = vmatpush.msra.mxu0 %v166
    %313 = vmatpush.msra.mxu0 %v165
    %314 = vmatpush.msra.mxu0 %v164
    %315 = vmatpush.msra.mxu0 %v163
    %316 = vmatpush.msra.mxu0 %v162
    %317 = vmatpush.msra.mxu0 %v161
    %318 = vmatpush.msra.mxu0 %v160
    %319 = vmatpush.msra.mxu0 %v159
    %320 = vmatpush.msra.mxu0 %v158
    %321 = vmatmul.f32.gmra.mxu0 %v300
    %v322 = vpop.f32.mrf.mxu0
    %v323 = vadd.f32 0.0, %v322
    %324 = vdwg.mxu0
    %v325 = vadd.f32 %v304, %v323
    %v326 = vtanh.pop %v325
    %s327 = scalar_lea.vmem [#allocation7], 40
    %328 = vst [vmem:[%s327] sm:$0xff] %v326
    %s329 = scalar_lea.vmem [#allocation3], 48
    %v330 = vld [vmem:[%s329] sm:$0xff]
    %331 = vmatpush.msra.mxu0 %v173
    %332 = vmatpush.msra.mxu0 %v172
    %333 = vmatpush.msra.mxu0 %v171
    %334 = vmatpush.msra.mxu0 %v170
    %335 = vmatpush.msra.mxu0 %v169
    %336 = vmatpush.msra.mxu0 %v168
    %337 = vmatpush.msra.mxu0 %v167
    %338 = vmatpush.msra.mxu0 %v166
    %339 = vmatpush.msra.mxu0 %v165
    %340 = vmatpush.msra.mxu0 %v164
    %341 = vmatpush.msra.mxu0 %v163
    %342 = vmatpush.msra.mxu0 %v162
    %343 = vmatpush.msra.mxu0 %v161
    %344 = vmatpush.msra.mxu0 %v160
    %345 = vmatpush.msra.mxu0 %v159
    %346 = vmatpush.msra.mxu0 %v158
    %347 = vmatmul.f32.gmra.mxu0 %v326
    %v348 = vpop.f32.mrf.mxu0
    %v349 = vadd.f32 0.0, %v348
    %350 = vdwg.mxu0
    %v351 = vadd.f32 %v330, %v349
    %v352 = vtanh.pop %v351
    %s353 = scalar_lea.vmem [#allocation7], 48
    %354 = vst [vmem:[%s353] sm:$0xff] %v352
    %s355 = scalar_lea.vmem [#allocation3], 56
    %v356 = vld [vmem:[%s355] sm:$0xff]
    %357 = vmatpush.msra.mxu0 %v173
    %358 = vmatpush.msra.mxu0 %v172
    %359 = vmatpush.msra.mxu0 %v171
    %360 = vmatpush.msra.mxu0 %v170
    %361 = vmatpush.msra.mxu0 %v169
    %362 = vmatpush.msra.mxu0 %v168
    %363 = vmatpush.msra.mxu0 %v167
    %364 = vmatpush.msra.mxu0 %v166
    %365 = vmatpush.msra.mxu0 %v165
    %366 = vmatpush.msra.mxu0 %v164
    %367 = vmatpush.msra.mxu0 %v163
    %368 = vmatpush.msra.mxu0 %v162
    %369 = vmatpush.msra.mxu0 %v161
    %370 = vmatpush.msra.mxu0 %v160
    %371 = vmatpush.msra.mxu0 %v159
    %372 = vmatpush.msra.mxu0 %v158
    %373 = vmatmul.f32.gmra.mxu0 %v352
    %v374 = vpop.f32.mrf.mxu0
    %v375 = vadd.f32 0.0, %v374
    %376 = vdwg.mxu0
    %v377 = vadd.f32 %v356, %v375
    %v378 = vtanh.pop %v377
    %s379 = scalar_lea.vmem [#allocation7], 56
    %380 = vst [vmem:[%s379] sm:$0xff] %v378
    %381 = vst [vmem:[#allocation2] sm:$0xff] %v378
    // Predicated region
    $region30: #{tpu_custom_call.1} parent=1 // pred_check
      _
    $region31: #{tpu_custom_call.1} parent=1 // pred_check_branch
      %383 = sbr.rel (0) target = $region33
    $region32: #{tpu_custom_call.1} parent=1 // pred_region
      %s384 = sadd.s32 0, 0
      %s385 = smul.u32 8, %s384
      %387 = vsyncadd [#allocation6], 0
      %s388 = smul.addr %s385, 8
      %s389 = scalar_lea.hbm %s5, %s388
      %s390 = sshll.u32 [#allocation7], 4
      %s391 = int_to_ptr.vmem [resolvable:$true] %s390
      %s392 = sshll.u32 %s389, 4
      %s393 = int_to_ptr.hbm [resolvable:$true] %s392
      %398 = dma.vmem_to_hbm [thread:$0]  %s391, 1024, %s393, [#allocation6], 128, 128, 8
    $region33: #{tpu_custom_call.1} parent=1 // pred_fallthru
      _
    // Predicated region
    $region34: #{tpu_custom_call.1} parent=1 // pred_check
      _
    $region35: #{tpu_custom_call.1} parent=1 // pred_check_branch
      %400 = sbr.rel (0) target = $region37
    $region36: #{tpu_custom_call.1} parent=1 // pred_region
      %402 = dma.done [#allocation6], 1024
    $region37: #{tpu_custom_call.1} parent=1 // pred_fallthru
      _
    %403 = vsyncpa [#allocation5], 1
    %404 = vsyncpa [#allocation6], 1

</llo_original>
